<compile_context>
chip_gen: v7x
topology: tpu7x:2x2x1
jax: 0.10.0
libtpu: 0.0.40
codegen_flags: <defaults>
</compile_context>

<pallas_src>
import functools

import jax
import jax.numpy as jnp
from jax.experimental import pallas as pl
from jax.experimental.pallas import tpu as pltpu

# Above v5e's 16 MiB scoped-VMEM default, below v7x's 64 MiB physical VMEM.
_VMEM_LIMIT_BYTES = 48 * 1024 * 1024


# ---------------------------------------------------------------------------
# tiling helpers
# ---------------------------------------------------------------------------
def _pick_row_tile(m, target, align=8):
    """Largest divisor of m that is a multiple of `align` and <= target.
    Falls back to the full extent (a full-dim block is always legal)."""
    best = None
    for d in range(1, m + 1):
        if m % d == 0 and d <= target and d % align == 0:
            best = d
    return best if best is not None else m


def _pick_subchunks(tr, max_sub=4, min_rows=64):
    """Split a row tile into n sub-chunks (each a multiple of 8 rows) so the
    EUP exp of one chunk can be scheduled against the MXU matmuls of the
    neighbouring chunks inside one grid step."""
    for n in range(max_sub, 1, -1):
        if tr % n == 0 and (tr // n) % 8 == 0 and (tr // n) >= min_rows:
            return n
    return 1


# ---------------------------------------------------------------------------
# kernel A: shared 1x1 conv_reduce (+ folded-BN shift + ReLU), K resident
# ---------------------------------------------------------------------------
def _reduce_conv_kernel(x_ref, w_ref, s_ref, o_ref):
    y = jnp.dot(x_ref[...], w_ref[...], preferred_element_type=jnp.float32)
    o_ref[...] = jnp.maximum(y + s_ref[...], 0.0).astype(o_ref.dtype)


def reduce_conv(x_flat, w, shift, *, tm_target=600):
    """x_flat: (M, Cin) bf16 pixel rows; w: (Cin, 2*Cr) bf16 (both branches'
    reduce weights concatenated, BN scale folded in); shift: (1, 2*Cr) f32."""
    M, Cin = x_flat.shape
    Cout = w.shape[1]
    tm = _pick_row_tile(M, tm_target)
    return pl.pallas_call(
        _reduce_conv_kernel,
        out_shape=jax.ShapeDtypeStruct((M, Cout), jnp.bfloat16),
        grid=(M // tm,),
        in_specs=[
            pl.BlockSpec((tm, Cin), lambda i: (i, 0)),
            pl.BlockSpec((Cin, Cout), lambda i: (0, 0)),   # resident weight (nk == 1)
            pl.BlockSpec((1, Cout), lambda i: (0, 0)),
        ],
        out_specs=pl.BlockSpec((tm, Cout), lambda i: (i, 0)),
        compiler_params=pltpu.CompilerParams(
            dimension_semantics=("parallel",),
            vmem_limit_bytes=_VMEM_LIMIT_BYTES),
    )(x_flat, w, shift)


# ---------------------------------------------------------------------------
# kernel B: fused att1 ConvBNReLU + att2 Conv + softmax(dim=1) + bmm
# ---------------------------------------------------------------------------
def _psa_attn_kernel(n_sub, r_ref, w1_ref, s1_ref, w2_ref, o_ref):
    # r_ref : (HW, Cr)   bf16  reduce_x, full spatial extent, this branch/batch
    # w1_ref: (Cr, Cr)   bf16  attention[0] weight (BN scale folded)
    # s1_ref: (1, Cr)    f32   attention[0] folded BN shift
    # w2_ref: (Cr, Catt) bf16  attention[1] weight (bias-free), Catt == HW
    # o_ref : (tr, Cr)   f32   fm rows, written into this branch's Cr-half
    tr = o_ref.shape[0]
    sub = tr // n_sub
    base = pl.program_id(2) * tr
    r_full = r_ref[...]
    w1 = w1_ref[...]
    s1 = s1_ref[...]
    w2 = w2_ref[...]
    for c in range(n_sub):        # sub-chunking: EUP exp overlaps MXU matmuls
        start = pl.multiple_of(base + c * sub, 8)
        rows = r_ref[pl.ds(start, sub), :]                               # (sub, Cr)
        a1 = jnp.dot(rows, w1, preferred_element_type=jnp.float32) + s1
        a1 = jnp.maximum(a1, 0.0).astype(w2.dtype)
        logits = jnp.dot(a1, w2, preferred_element_type=jnp.float32)     # (sub, Catt)
        m = jnp.max(logits, axis=-1, keepdims=True)
        e = jnp.exp(logits - m)                                          # unnormalised
        denom = jnp.sum(e, axis=-1, keepdims=True)
        fm = jnp.dot(e.astype(r_full.dtype), r_full,
                     preferred_element_type=jnp.float32)                 # (sub, Cr)
        # normalise AFTER the matmul (7x less VPU work than scaling the probs)
        o_ref[pl.ds(c * sub, sub), :] = (
            fm * pl.reciprocal(denom, approx=True)).astype(o_ref.dtype)


def psa_attention(r_cat, w1, s1, w2, *, tr_target=360):
    """r_cat: (N, HW, 2*Cr) bf16 (collect | distribute halves);
    w1: (2, Cr, Cr), s1: (2, 1, Cr), w2: (2, Cr, Catt) with Catt == HW.
    Returns (N, HW, 2*Cr) f32, already channel-concatenated like torch.cat."""
    N, HW, Cr2 = r_cat.shape
    Cr = Cr2 // 2
    Catt = w2.shape[2]
    assert Catt == HW, "attention out_channels must equal H*W (PSANet bmm)"
    assert Cr % 128 == 0, "reduced_channels must be a multiple of 128"
    tr = _pick_row_tile(HW, tr_target)
    n_sub = _pick_subchunks(tr)
    return pl.pallas_call(
        functools.partial(_psa_attn_kernel, n_sub),
        out_shape=jax.ShapeDtypeStruct((N, HW, 2 * Cr), jnp.float32),
        # branch axis outermost: per-branch weights are fetched once, and on
        # v7x the 2-wide parallel axis splits evenly across the 2 TensorCores.
        grid=(2, N, HW // tr),
        in_specs=[
            pl.BlockSpec((None, HW, Cr), lambda b, n, i: (n, 0, b)),     # r half
            pl.BlockSpec((None, Cr, Cr), lambda b, n, i: (b, 0, 0)),     # w1
            pl.BlockSpec((None, 1, Cr), lambda b, n, i: (b, 0, 0)),      # shift1
            pl.BlockSpec((None, Cr, Catt), lambda b, n, i: (b, 0, 0)),   # w2
        ],
        out_specs=pl.BlockSpec((None, tr, Cr), lambda b, n, i: (n, i, b)),
        compiler_params=pltpu.CompilerParams(
            dimension_semantics=("parallel", "parallel", "parallel"),
            vmem_limit_bytes=_VMEM_LIMIT_BYTES),
    )(r_cat, w1, s1, w2)


# ---------------------------------------------------------------------------
# parameters (deterministic; eval-mode BN folded, scale folded into weights)
# ---------------------------------------------------------------------------
def _fold_bn(key, cout):
    kg, kb, km, kv = jax.random.split(key, 4)
    gamma = 1.0 + 0.1 * jax.random.normal(kg, (cout,), jnp.float32)
    beta = 0.1 * jax.random.normal(kb, (cout,), jnp.float32)
    mean = 0.1 * jax.random.normal(km, (cout,), jnp.float32)
    var = 0.5 + jnp.abs(jax.random.normal(kv, (cout,), jnp.float32))
    scale = gamma / jnp.sqrt(var + 1e-5)
    shift = beta - mean * scale
    return scale, shift


def _conv_bn_relu_params(key, cin, cout):
    kw, kbn = jax.random.split(key)
    w = 0.05 * jax.random.normal(kw, (cin, cout), jnp.float32)
    scale, shift = _fold_bn(kbn, cout)
    return {"w": w * scale[None, :], "shift": shift}     # BN scale folded into w


def _attn_gen_params(key, cin, cr, catt):
    k1, k2, k3 = jax.random.split(key, 3)
    return {
        "reduce": _conv_bn_relu_params(k1, cin, cr),                      # conv_reduce
        "att1": _conv_bn_relu_params(k2, cr, cr),                         # attention[0]
        "att2_w": 0.05 * jax.random.normal(k3, (cr, catt), jnp.float32),  # attention[1]
    }


def init_params(key, cin, cr, catt):
    k1, k2 = jax.random.split(key)
    return {"collect": _attn_gen_params(k1, cin, cr, catt),
            "distribute": _attn_gen_params(k2, cin, cr, catt)}


def prepare_kernel_params(params):
    """Pack collect/distribute params for the fused kernels (bf16 weights)."""
    c, d = params["collect"], params["distribute"]
    return {
        "w_reduce": jnp.concatenate([c["reduce"]["w"], d["reduce"]["w"]],
                                    axis=1).astype(jnp.bfloat16),          # (Cin, 2Cr)
        "s_reduce": jnp.concatenate([c["reduce"]["shift"], d["reduce"]["shift"]]
                                    )[None, :].astype(jnp.float32),        # (1, 2Cr)
        "w1": jnp.stack([c["att1"]["w"], d["att1"]["w"]]).astype(jnp.bfloat16),
        "s1": jnp.stack([c["att1"]["shift"], d["att1"]["shift"]]
                        )[:, None, :].astype(jnp.float32),
        "w2": jnp.stack([c["att2_w"], d["att2_w"]]).astype(jnp.bfloat16),
    }


# ---------------------------------------------------------------------------
# forward pass
# ---------------------------------------------------------------------------
def pointwise_spatial_attention(x_nchw, kp):
    """_PointwiseSpatialAttention.forward: (N, Cin, H, W) -> (N, 2*Cr, H, W)."""
    N, Cin, H, W = x_nchw.shape
    HW = H * W
    Cr2 = kp["w_reduce"].shape[1]
    # bf16 cast BEFORE the NCHW -> channels-last relayout (half the traffic).
    x_flat = x_nchw.astype(jnp.bfloat16).transpose(0, 2, 3, 1).reshape(N * HW, Cin)
    r_cat = reduce_conv(x_flat, kp["w_reduce"], kp["s_reduce"])      # (N*HW, 2Cr) bf16
    fm = psa_attention(r_cat.reshape(N, HW, Cr2),
                       kp["w1"], kp["s1"], kp["w2"])                 # (N, HW, 2Cr) f32
    # fm already holds [collect | distribute] on the channel axis (torch cat dim=1);
    # only the channels-last -> NCHW interface relayout remains in XLA.
    return fm.reshape(N, H, W, Cr2).transpose(0, 3, 1, 2)


# ---------------------------------------------------------------------------
# pure-JAX reference (mirrors the PyTorch module, f32) for a sanity check
# ---------------------------------------------------------------------------
def psa_reference(x_nchw, params):
    def conv_bn_relu(x, p):
        y = jnp.einsum("nchw,cd->ndhw", x, p["w"]) + p["shift"][None, :, None, None]
        return jnp.maximum(y, 0.0)

    def attn_gen(x, p):
        r = conv_bn_relu(x, p["reduce"])
        a = conv_bn_relu(r, p["att1"])
        a = jnp.einsum("nchw,cd->ndhw", a, p["att2_w"])
        n, c, h, w = a.shape
        s = jax.nn.softmax(a.reshape(n, c, h * w), axis=1)
        fm = jnp.einsum("ncj,njs->ncs", r.reshape(n, r.shape[1], h * w), s)
        return fm.reshape(n, r.shape[1], h, w)

    c = attn_gen(x_nchw, params["collect"])
    d = attn_gen(x_nchw, params["distribute"])
    return jnp.concatenate([c, d], axis=1)


# ---------------------------------------------------------------------------
if __name__ == "__main__":
    # Small analogue: attention out_channels must equal H*W, so H = W = 8.
    N, Cin, H, W = 2, 32, 8, 8
    HW = H * W        # == attention out_channels (3600 = 60*60 in the original)
    Cr = 128          # stands for reduced_channels = 512 (multiple of 128)

    key = jax.random.PRNGKey(0)
    kx, kp = jax.random.split(key)
    x = jax.random.normal(kx, (N, Cin, H, W), jnp.float32)
    params = init_params(kp, Cin, Cr, HW)
    kparams = prepare_kernel_params(params)

    fwd = jax.jit(pointwise_spatial_attention)
    out = jax.block_until_ready(fwd(x, kparams))
    assert out.shape == (N, 2 * Cr, H, W), out.shape
    assert bool(jnp.all(jnp.isfinite(out)))

    ref = psa_reference(x, params)
    err = float(jnp.max(jnp.abs(out - ref)))
    scale = float(jnp.max(jnp.abs(ref))) + 1e-6
    assert err <= 2e-2 + 2e-2 * scale, (err, scale)

    print("KERNEL_OK")
</pallas_src>

<mosaic_0001>
module attributes {stable_mosaic.version = 11 : i64} {
  func.func @_psa_attn_kernel(%arg0: i32, %arg1: i32, %arg2: i32, %arg3: memref<1x64x128xbf16, #tpu.memory_space<vmem>>, %arg4: memref<1x128x128xbf16, #tpu.memory_space<vmem>>, %arg5: memref<1x1x128xf32, #tpu.memory_space<vmem>>, %arg6: memref<1x128x64xbf16, #tpu.memory_space<vmem>>, %arg7: memref<1x64x128xf32, #tpu.memory_space<vmem>>) attributes {dimension_semantics = [#tpu.dimension_semantics<parallel>, #tpu.dimension_semantics<parallel>, #tpu.dimension_semantics<parallel>], iteration_bounds = array<i64: 2, 2, 1>, scalar_prefetch = 0 : i64, scratch_operands = 0 : i64, tpu.core_type = #tpu.core_type<tc>, window_params = [{transform_indices = @transform_0, window_bounds = array<i64: 1, 64, 128>}, {transform_indices = @transform_1, window_bounds = array<i64: 1, 128, 128>}, {transform_indices = @transform_2, window_bounds = array<i64: 1, 1, 128>}, {transform_indices = @transform_3, window_bounds = array<i64: 1, 128, 64>}, {transform_indices = @transform_4, window_bounds = array<i64: 1, 64, 128>}]} {
    %c64_i32 = arith.constant 64 : i32
    %0 = arith.muli %arg2, %c64_i32 : i32
    %c0 = arith.constant 0 : index
    %c0_0 = arith.constant 0 : index
    %c0_1 = arith.constant 0 : index
    %1 = vector.load %arg3[%c0, %c0_0, %c0_1] : memref<1x64x128xbf16, #tpu.memory_space<vmem>>, vector<1x64x128xbf16>
    %2 = vector.shape_cast %1 : vector<1x64x128xbf16> to vector<64x128xbf16>
    %c0_2 = arith.constant 0 : index
    %c0_3 = arith.constant 0 : index
    %c0_4 = arith.constant 0 : index
    %3 = vector.load %arg4[%c0_2, %c0_3, %c0_4] : memref<1x128x128xbf16, #tpu.memory_space<vmem>>, vector<1x128x128xbf16>
    %4 = vector.shape_cast %3 : vector<1x128x128xbf16> to vector<128x128xbf16>
    %c0_5 = arith.constant 0 : index
    %c0_6 = arith.constant 0 : index
    %c0_7 = arith.constant 0 : index
    %5 = vector.load %arg5[%c0_5, %c0_6, %c0_7] : memref<1x1x128xf32, #tpu.memory_space<vmem>>, vector<1x1x128xf32>
    %6 = vector.shape_cast %5 : vector<1x1x128xf32> to vector<1x128xf32>
    %c0_8 = arith.constant 0 : index
    %c0_9 = arith.constant 0 : index
    %c0_10 = arith.constant 0 : index
    %7 = vector.load %arg6[%c0_8, %c0_9, %c0_10] : memref<1x128x64xbf16, #tpu.memory_space<vmem>>, vector<1x128x64xbf16>
    %8 = vector.shape_cast %7 : vector<1x128x64xbf16> to vector<128x64xbf16>
    %c0_i32 = arith.constant 0 : i32
    %9 = arith.addi %0, %c0_i32 : i32
    %10 = tpu.assume_multiple %9, 8 : i32
    %c0_11 = arith.constant 0 : index
    %11 = arith.index_cast %10 : i32 to index
    %c0_12 = arith.constant 0 : index
    %12 = vector.load %arg3[%c0_11, %11, %c0_12] : memref<1x64x128xbf16, #tpu.memory_space<vmem>>, vector<1x64x128xbf16>
    %13 = vector.shape_cast %12 : vector<1x64x128xbf16> to vector<64x128xbf16>
    %cst = arith.constant dense<0.000000e+00> : vector<64x128xf32>
    %14 = tpu.matmul %13, %4, %cst {dimension_numbers = #tpu.dot_dimension_numbers<[1], [0], [0], [1], [0, 0, 1, 1], [], []>} : vector<64x128xbf16>, vector<128x128xbf16>, vector<64x128xf32> -> vector<64x128xf32>
    %15 = vector.broadcast %6 : vector<1x128xf32> to vector<64x128xf32>
    %16 = arith.addf %14, %15 : vector<64x128xf32>
    %cst_13 = arith.constant 0.000000e+00 : f32
    %17 = vector.broadcast %cst_13 : f32 to vector<64x128xf32>
    %18 = arith.maximumf %16, %17 : vector<64x128xf32>
    %19 = arith.truncf %18 : vector<64x128xf32> to vector<64x128xbf16>
    %cst_14 = arith.constant dense<0.000000e+00> : vector<64x64xf32>
    %20 = tpu.matmul %19, %8, %cst_14 {dimension_numbers = #tpu.dot_dimension_numbers<[1], [0], [0], [1], [0, 0, 1, 1], [], []>} : vector<64x128xbf16>, vector<128x64xbf16>, vector<64x64xf32> -> vector<64x64xf32>
    %cst_15 = arith.constant dense<0xFF800000> : vector<64xf32>
    %21 = vector.multi_reduction <maximumf>, %20, %cst_15 [1] : vector<64x64xf32> to vector<64xf32>
    %22 = vector.shape_cast %21 : vector<64xf32> to vector<64x1xf32>
    %23 = vector.broadcast %22 : vector<64x1xf32> to vector<64x64xf32>
    %24 = arith.subf %20, %23 : vector<64x64xf32>
    %25 = math.exp %24 : vector<64x64xf32>
    %cst_16 = arith.constant dense<0.000000e+00> : vector<64xf32>
    %26 = vector.multi_reduction <add>, %25, %cst_16 [1] : vector<64x64xf32> to vector<64xf32>
    %27 = vector.shape_cast %26 : vector<64xf32> to vector<64x1xf32>
    %28 = arith.truncf %25 : vector<64x64xf32> to vector<64x64xbf16>
    %cst_17 = arith.constant dense<0.000000e+00> : vector<64x128xf32>
    %29 = tpu.matmul %28, %2, %cst_17 {dimension_numbers = #tpu.dot_dimension_numbers<[1], [0], [0], [1], [0, 0, 1, 1], [], []>} : vector<64x64xbf16>, vector<64x128xbf16>, vector<64x128xf32> -> vector<64x128xf32>
    %30 = tpu.reciprocal %27 {approx = true} : vector<64x1xf32> -> vector<64x1xf32>
    %31 = vector.broadcast %30 : vector<64x1xf32> to vector<64x128xf32>
    %32 = arith.mulf %29, %31 : vector<64x128xf32>
    %c0_18 = arith.constant 0 : index
    %c0_19 = arith.constant 0 : index
    %c0_20 = arith.constant 0 : index
    %33 = vector.load %arg7[%c0_18, %c0_19, %c0_20] : memref<1x64x128xf32, #tpu.memory_space<vmem>>, vector<1x64x128xf32>
    %34 = vector.shape_cast %33 : vector<1x64x128xf32> to vector<64x128xf32>
    %35 = vector.shape_cast %32 : vector<64x128xf32> to vector<1x64x128xf32>
    tpu.vector_store %arg7[%c0_18, %c0_19, %c0_20], %35 {strides = array<i32>} : memref<1x64x128xf32, #tpu.memory_space<vmem>>, vector<1x64x128xf32>,
    return
  }
  func.func @transform_0(%arg0: i32, %arg1: i32, %arg2: i32) -> (i32, i32, i32) {
    %c0_i32 = arith.constant 0 : i32
    %c0_i32_0 = arith.constant 0 : i32
    return %arg1, %c0_i32, %arg0 : i32, i32, i32
  }
  func.func @transform_1(%arg0: i32, %arg1: i32, %arg2: i32) -> (i32, i32, i32) {
    %c0_i32 = arith.constant 0 : i32
    %c0_i32_0 = arith.constant 0 : i32
    %c0_i32_1 = arith.constant 0 : i32
    return %arg0, %c0_i32, %c0_i32_0 : i32, i32, i32
  }
  func.func @transform_2(%arg0: i32, %arg1: i32, %arg2: i32) -> (i32, i32, i32) {
    %c0_i32 = arith.constant 0 : i32
    %c0_i32_0 = arith.constant 0 : i32
    %c0_i32_1 = arith.constant 0 : i32
    return %arg0, %c0_i32, %c0_i32_0 : i32, i32, i32
  }
  func.func @transform_3(%arg0: i32, %arg1: i32, %arg2: i32) -> (i32, i32, i32) {
    %c0_i32 = arith.constant 0 : i32
    %c0_i32_0 = arith.constant 0 : i32
    %c0_i32_1 = arith.constant 0 : i32
    return %arg0, %c0_i32, %c0_i32_0 : i32, i32, i32
  }
  func.func @transform_4(%arg0: i32, %arg1: i32, %arg2: i32) -> (i32, i32, i32) {
    %c0_i32 = arith.constant 0 : i32
    return %arg1, %arg2, %arg0 : i32, i32, i32
  }
}

module attributes {stable_mosaic.version = 11 : i64} {
  func.func @_reduce_conv_kernel(%arg0: i32, %arg1: memref<128x32xbf16, #tpu.memory_space<vmem>>, %arg2: memref<32x256xbf16, #tpu.memory_space<vmem>>, %arg3: memref<1x256xf32, #tpu.memory_space<vmem>>, %arg4: memref<128x256xbf16, #tpu.memory_space<vmem>>) attributes {dimension_semantics = [#tpu.dimension_semantics<parallel>], iteration_bounds = array<i64: 1>, scalar_prefetch = 0 : i64, scratch_operands = 0 : i64, tpu.core_type = #tpu.core_type<tc>, window_params = [{transform_indices = @transform_0, window_bounds = array<i64: 128, 32>}, {pipeline_mode = #tpu.pipeline_mode<synchronous>, transform_indices = @transform_1, window_bounds = array<i64: 32, 256>}, {pipeline_mode = #tpu.pipeline_mode<synchronous>, transform_indices = @transform_2, window_bounds = array<i64: 1, 256>}, {transform_indices = @transform_3, window_bounds = array<i64: 128, 256>}]} {
    %c0 = arith.constant 0 : index
    %c0_0 = arith.constant 0 : index
    %0 = vector.load %arg1[%c0, %c0_0] : memref<128x32xbf16, #tpu.memory_space<vmem>>, vector<128x32xbf16>
    %c0_1 = arith.constant 0 : index
    %c0_2 = arith.constant 0 : index
    %1 = vector.load %arg2[%c0_1, %c0_2] : memref<32x256xbf16, #tpu.memory_space<vmem>>, vector<32x256xbf16>
    %cst = arith.constant dense<0.000000e+00> : vector<128x256xf32>
    %2 = tpu.matmul %0, %1, %cst {dimension_numbers = #tpu.dot_dimension_numbers<[1], [0], [0], [1], [0, 0, 1, 1], [], []>} : vector<128x32xbf16>, vector<32x256xbf16>, vector<128x256xf32> -> vector<128x256xf32>
    %c0_3 = arith.constant 0 : index
    %c0_4 = arith.constant 0 : index
    %3 = vector.load %arg3[%c0_3, %c0_4] : memref<1x256xf32, #tpu.memory_space<vmem>>, vector<1x256xf32>
    %4 = vector.broadcast %3 : vector<1x256xf32> to vector<128x256xf32>
    %5 = arith.addf %2, %4 : vector<128x256xf32>
    %cst_5 = arith.constant 0.000000e+00 : f32
    %6 = vector.broadcast %cst_5 : f32 to vector<128x256xf32>
    %7 = arith.maximumf %5, %6 : vector<128x256xf32>
    %8 = arith.truncf %7 : vector<128x256xf32> to vector<128x256xbf16>
    %c0_6 = arith.constant 0 : index
    %c0_7 = arith.constant 0 : index
    %9 = vector.load %arg4[%c0_6, %c0_7] : memref<128x256xbf16, #tpu.memory_space<vmem>>, vector<128x256xbf16>
    tpu.vector_store %arg4[%c0_6, %c0_7], %8 {strides = array<i32>} : memref<128x256xbf16, #tpu.memory_space<vmem>>, vector<128x256xbf16>,
    return
  }
  func.func @transform_0(%arg0: i32) -> (i32, i32) {
    %c0_i32 = arith.constant 0 : i32
    %c0_i32_0 = arith.constant 0 : i32
    return %arg0, %c0_i32 : i32, i32
  }
  func.func @transform_1(%arg0: i32) -> (i32, i32) {
    %c0_i32 = arith.constant 0 : i32
    %c0_i32_0 = arith.constant 0 : i32
    %c0_i32_1 = arith.constant 0 : i32
    return %c0_i32, %c0_i32_0 : i32, i32
  }
  func.func @transform_2(%arg0: i32) -> (i32, i32) {
    %c0_i32 = arith.constant 0 : i32
    %c0_i32_0 = arith.constant 0 : i32
    %c0_i32_1 = arith.constant 0 : i32
    return %c0_i32, %c0_i32_0 : i32, i32
  }
  func.func @transform_3(%arg0: i32) -> (i32, i32) {
    %c0_i32 = arith.constant 0 : i32
    %c0_i32_0 = arith.constant 0 : i32
    return %arg0, %c0_i32 : i32, i32
  }
}

</mosaic_0001>

<llo_original>
// kernel: pointwise_spatial_attention.2
$region0: #{pointwise_spatial_attention.2}
  #allocation0 [shape = 'u32[]', space=smem, size = 0x4, offset = 0x4, fixed_abs, tag = 'smem constant byte address 0x4 - core index']
  #allocation1 [shape = 'u32[144,128]{1,0:T(1,128)}', space=vmem, size = 0x12000, scoped, tag = 'internal scratch']
  %s0 = inlined_call_operand.vmem [shape: bf16[128,32], index: 0, kind: input, shape index: {}]
  %s1 = inlined_call_operand.vmem [shape: bf16[32,256], index: 1, kind: input, shape index: {}]
  %s2 = inlined_call_operand.vmem [shape: f32[1,256], index: 2, kind: input, shape index: {}]
  %s3 = inlined_call_operand.vmem [shape: bf16[128,256], index: 3, kind: output, shape index: {}]
  %s4 = sld [smem:[#allocation0]]
  $region22: #{pointwise_spatial_attention.2} parent=0
    _
  %s6 = ssub.s32 1, %s4
  %s7 = scalar_select 0, %s6, %s4
  // Predicated region
  $region2: #{pointwise_spatial_attention.2} parent=0 // pred_check
    _
  $region3: #{pointwise_spatial_attention.2} parent=0 // pred_check_branch
    %9 = sbr.rel (0) target = $region5
  $region4: #{pointwise_spatial_attention.2} parent=0 // pred_region
    _
  $region5: #{pointwise_spatial_attention.2} parent=0 // pred_fallthru
    _
  // Predicated region
  $region6: #{pointwise_spatial_attention.2} parent=0 // pred_check
    _
  $region7: #{pointwise_spatial_attention.2} parent=0 // pred_check_branch
    %11 = sbr.rel (0) target = $region9
  $region8: #{pointwise_spatial_attention.2} parent=0 // pred_region
    _
  $region9: #{pointwise_spatial_attention.2} parent=0 // pred_fallthru
    _
  // Predicated region
  $region10: #{pointwise_spatial_attention.2} parent=0 // pred_check
    _
  $region11: #{pointwise_spatial_attention.2} parent=0 // pred_check_branch
    %13 = sbr.rel (0) target = $region13
  $region12: #{pointwise_spatial_attention.2} parent=0 // pred_region
    _
  $region13: #{pointwise_spatial_attention.2} parent=0 // pred_fallthru
    _
  %v15 = vld [vmem:[%s0] sm:$0xf]
  %v16 = vld [vmem:[%s0 + $0x4] sm:$0xf]
  %v17 = vld [vmem:[%s0 + $0x8] sm:$0xf]
  %v18 = vld [vmem:[%s0 + $0xc] sm:$0xf]
  %v19 = vld [vmem:[%s0 + $0x10] sm:$0xf]
  %v20 = vld [vmem:[%s0 + $0x14] sm:$0xf]
  %v21 = vld [vmem:[%s0 + $0x18] sm:$0xf]
  %v22 = vld [vmem:[%s0 + $0x1c] sm:$0xf]
  %v23 = vld [vmem:[%s0 + $0x20] sm:$0xf]
  %v24 = vld [vmem:[%s0 + $0x24] sm:$0xf]
  %v25 = vld [vmem:[%s0 + $0x28] sm:$0xf]
  %v26 = vld [vmem:[%s0 + $0x2c] sm:$0xf]
  %v27 = vld [vmem:[%s0 + $0x30] sm:$0xf]
  %v28 = vld [vmem:[%s0 + $0x34] sm:$0xf]
  %v29 = vld [vmem:[%s0 + $0x38] sm:$0xf]
  %v30 = vld [vmem:[%s0 + $0x3c] sm:$0xf]
  %v31 = vld [vmem:[%s1] sm:$0xff]
  %v32 = vld [vmem:[%s1 + $0x8] sm:$0xff]
  %v33 = vld [vmem:[%s1 + $0x10] sm:$0xff]
  %v34 = vld [vmem:[%s1 + $0x18] sm:$0xff]
  %v35 = vld [vmem:[%s2] sm:$0x3]
  %v37 = vlaneseq
  %v38 = vshrl.u32 %v37, 7
  %v39 = vsub.s32 0, %v38
  %v40 = vrot.slane %v35, %v39
  %v41 = vlaneseq
  %v42 = vshrl.u32 %v41, 7
  %v43 = vsub.s32 1, %v42
  %v44 = vrot.slane %v35, %v43
  %v63 = vunpack.c.l.b16 %v15
  %v64 = vunpack.c.l.b16 %v16
  %v65 = vunpack.c.l.b16 %v17
  %v66 = vunpack.c.l.b16 %v18
  %v67 = vunpack.c.l.b16 %v19
  %v68 = vunpack.c.l.b16 %v20
  %v69 = vunpack.c.l.b16 %v21
  %v70 = vunpack.c.l.b16 %v22
  %v71 = vunpack.c.l.b16 %v23
  %v72 = vunpack.c.l.b16 %v24
  %v73 = vunpack.c.l.b16 %v25
  %v74 = vunpack.c.l.b16 %v26
  %v75 = vunpack.c.l.b16 %v27
  %v76 = vunpack.c.l.b16 %v28
  %v77 = vunpack.c.l.b16 %v29
  %v78 = vunpack.c.l.b16 %v30
  %v79 = vpack.c.b16 %v64, %v63
  %v80 = vpack.c.b16 %v66, %v65
  %v81 = vpack.c.b16 %v68, %v67
  %v82 = vpack.c.b16 %v70, %v69
  %v83 = vpack.c.b16 %v72, %v71
  %v84 = vpack.c.b16 %v74, %v73
  %v85 = vpack.c.b16 %v76, %v75
  %v86 = vpack.c.b16 %v78, %v77
  %v91 = vunpack.c.l.b16 %v31
  %v92 = vunpack.c.h.b16 %v31
  %v93 = vunpack.c.l.b16 %v32
  %v94 = vunpack.c.h.b16 %v32
  %v95 = vunpack.c.l.b16 %v33
  %v96 = vunpack.c.h.b16 %v33
  %v97 = vunpack.c.l.b16 %v34
  %v98 = vunpack.c.h.b16 %v34
  %v99 = vpack.c.b16 %v93, %v91
  %v100 = vpack.c.b16 %v94, %v92
  %v101 = vpack.c.b16 %v97, %v95
  %v102 = vpack.c.b16 %v98, %v96
  %vm107 = vcmask 261120
  %v109 = vsel %vm107, %v79, 0
  %v112 = vsel %vm107, %v80, 0
  %v115 = vsel %vm107, %v81, 0
  %v118 = vsel %vm107, %v82, 0
  %v121 = vsel %vm107, %v83, 0
  %v124 = vsel %vm107, %v84, 0
  %v127 = vsel %vm107, %v85, 0
  %v130 = vsel %vm107, %v86, 0
  %132 = vmatprep.subr.bf16.mxu0 %v100
  %133 = vmatpush1.bf16.msra.mxu0 %v99
  %134 = vmatprep.subr.bf16.mxu0 %v102
  %135 = vmatpush1.bf16.msra.mxu0 %v101
  %136 = vmatprep.subr.bf16.mxu0 0
  %137 = vmatpush1.bf16.msra.mxu0 0
  %138 = vmatprep.subr.bf16.mxu0 0
  %139 = vmatpush1.bf16.msra.mxu0 0
  %140 = vmatprep.subr.bf16.mxu0 0
  %141 = vmatpush1.bf16.msra.mxu0 0
  %142 = vmatprep.subr.bf16.mxu0 0
  %143 = vmatpush1.bf16.msra.mxu0 0
  %144 = vmatprep.subr.bf16.mxu0 0
  %145 = vmatpush1.bf16.msra.mxu0 0
  %146 = vmatprep.subr.bf16.mxu0 0
  %147 = vmatpush1.bf16.msra.mxu0 0
  %148 = vmatprep.subr.bf16.mxu0 0
  %149 = vmatpush1.bf16.msra.mxu0 0
  %150 = vmatprep.subr.bf16.mxu0 0
  %151 = vmatpush1.bf16.msra.mxu0 0
  %152 = vmatprep.subr.bf16.mxu0 0
  %153 = vmatpush1.bf16.msra.mxu0 0
  %154 = vmatprep.subr.bf16.mxu0 0
  %155 = vmatpush1.bf16.msra.mxu0 0
  %156 = vmatprep.subr.bf16.mxu0 0
  %157 = vmatpush1.bf16.msra.mxu0 0
  %158 = vmatprep.subr.bf16.mxu0 0
  %159 = vmatpush1.bf16.msra.mxu0 0
  %160 = vmatprep.subr.bf16.mxu0 0
  %161 = vmatpush1.bf16.msra.mxu0 0
  %162 = vmatprep.subr.bf16.mxu0 0
  %163 = vmatpush1.bf16.msra.mxu0 0
  %164 = vmatprep.mubr.bf16.mxu0 0
  %165 = vmatmul.mubr.bf16.gmra.mrb[0].mxu0 %v109
  %v166 = vpop.f32.mrb[0].mxu0
  %v167 = vadd.f32 %v40, %v166
  %v168 = vpop.f32.mrb[0].mxu0
  %v169 = vadd.f32 %v44, %v168
  %v170 = vpop.f32.mrb[0].mxu0
  %v171 = vadd.f32 %v40, %v170
  %v172 = vpop.f32.mrb[0].mxu0
  %v173 = vadd.f32 %v44, %v172
  %174 = vmatprep.mubr.bf16.mxu0 0
  %175 = vmatmul.mubr.bf16.gmra.mrb[0].mxu0 %v112
  %v176 = vpop.f32.mrb[0].mxu0
  %v177 = vadd.f32 %v40, %v176
  %v178 = vpop.f32.mrb[0].mxu0
  %v179 = vadd.f32 %v44, %v178
  %v180 = vpop.f32.mrb[0].mxu0
  %v181 = vadd.f32 %v40, %v180
  %v182 = vpop.f32.mrb[0].mxu0
  %v183 = vadd.f32 %v44, %v182
  %184 = vmatprep.mubr.bf16.mxu0 0
  %185 = vmatmul.mubr.bf16.gmra.mrb[0].mxu0 %v115
  %v186 = vpop.f32.mrb[0].mxu0
  %v187 = vadd.f32 %v40, %v186
  %v188 = vpop.f32.mrb[0].mxu0
  %v189 = vadd.f32 %v44, %v188
  %v190 = vpop.f32.mrb[0].mxu0
  %v191 = vadd.f32 %v40, %v190
  %v192 = vpop.f32.mrb[0].mxu0
  %v193 = vadd.f32 %v44, %v192
  %194 = vmatprep.mubr.bf16.mxu0 0
  %195 = vmatmul.mubr.bf16.gmra.mrb[0].mxu0 %v118
  %v196 = vpop.f32.mrb[0].mxu0
  %v197 = vadd.f32 %v40, %v196
  %v198 = vpop.f32.mrb[0].mxu0
  %v199 = vadd.f32 %v44, %v198
  %v200 = vpop.f32.mrb[0].mxu0
  %v201 = vadd.f32 %v40, %v200
  %v202 = vpop.f32.mrb[0].mxu0
  %v203 = vadd.f32 %v44, %v202
  %204 = vmatprep.mubr.bf16.mxu0 0
  %205 = vmatmul.mubr.bf16.gmra.mrb[0].mxu0 %v121
  %v206 = vpop.f32.mrb[0].mxu0
  %v207 = vadd.f32 %v40, %v206
  %v208 = vpop.f32.mrb[0].mxu0
  %v209 = vadd.f32 %v44, %v208
  %v210 = vpop.f32.mrb[0].mxu0
  %v211 = vadd.f32 %v40, %v210
  %v212 = vpop.f32.mrb[0].mxu0
  %v213 = vadd.f32 %v44, %v212
  %214 = vmatprep.mubr.bf16.mxu0 0
  %215 = vmatmul.mubr.bf16.gmra.mrb[0].mxu0 %v124
  %v216 = vpop.f32.mrb[0].mxu0
  %v217 = vadd.f32 %v40, %v216
  %v218 = vpop.f32.mrb[0].mxu0
  %v219 = vadd.f32 %v44, %v218
  %v220 = vpop.f32.mrb[0].mxu0
  %v221 = vadd.f32 %v40, %v220
  %v222 = vpop.f32.mrb[0].mxu0
  %v223 = vadd.f32 %v44, %v222
  %224 = vmatprep.mubr.bf16.mxu0 0
  %225 = vmatmul.mubr.bf16.gmra.mrb[0].mxu0 %v127
  %v226 = vpop.f32.mrb[0].mxu0
  %v227 = vadd.f32 %v40, %v226
  %v228 = vpop.f32.mrb[0].mxu0
  %v229 = vadd.f32 %v44, %v228
  %v230 = vpop.f32.mrb[0].mxu0
  %v231 = vadd.f32 %v40, %v230
  %v232 = vpop.f32.mrb[0].mxu0
  %v233 = vadd.f32 %v44, %v232
  %234 = vmatprep.mubr.bf16.mxu0 0
  %235 = vmatmul.mubr.bf16.gmra.mrb[0].mxu0 %v130
  %v236 = vpop.f32.mrb[0].mxu0
  %v237 = vadd.f32 %v40, %v236
  %v238 = vpop.f32.mrb[0].mxu0
  %v239 = vadd.f32 %v44, %v238
  %v240 = vpop.f32.mrb[0].mxu0
  %v241 = vadd.f32 %v40, %v240
  %v242 = vpop.f32.mrb[0].mxu0
  %v243 = vadd.f32 %v44, %v242
  %244 = vdwg.mxu0
  %v245 = vmax.f32 %v167, 0.0
  %v246 = vmax.f32 %v169, 0.0
  %v247 = vmax.f32 %v171, 0.0
  %v248 = vmax.f32 %v173, 0.0
  %v249 = vmax.f32 %v177, 0.0
  %v250 = vmax.f32 %v179, 0.0
  %v251 = vmax.f32 %v181, 0.0
  %v252 = vmax.f32 %v183, 0.0
  %v253 = vmax.f32 %v187, 0.0
  %v254 = vmax.f32 %v189, 0.0
  %v255 = vmax.f32 %v191, 0.0
  %v256 = vmax.f32 %v193, 0.0
  %v257 = vmax.f32 %v197, 0.0
  %v258 = vmax.f32 %v199, 0.0
  %v259 = vmax.f32 %v201, 0.0
  %v260 = vmax.f32 %v203, 0.0
  %v261 = vmax.f32 %v207, 0.0
  %v262 = vmax.f32 %v209, 0.0
  %v263 = vmax.f32 %v211, 0.0
  %v264 = vmax.f32 %v213, 0.0
  %v265 = vmax.f32 %v217, 0.0
  %v266 = vmax.f32 %v219, 0.0
  %v267 = vmax.f32 %v221, 0.0
  %v268 = vmax.f32 %v223, 0.0
  %v269 = vmax.f32 %v227, 0.0
  %v270 = vmax.f32 %v229, 0.0
  %v271 = vmax.f32 %v231, 0.0
  %v272 = vmax.f32 %v233, 0.0
  %v273 = vmax.f32 %v237, 0.0
  %v274 = vmax.f32 %v239, 0.0
  %v275 = vmax.f32 %v241, 0.0
  %v276 = vmax.f32 %v243, 0.0
  %v277 = vpack.c.bf16 %v247, %v245
  %v278 = vpack.c.bf16 %v248, %v246
  %v279 = vpack.c.bf16 %v251, %v249
  %v280 = vpack.c.bf16 %v252, %v250
  %v281 = vpack.c.bf16 %v255, %v253
  %v282 = vpack.c.bf16 %v256, %v254
  %v283 = vpack.c.bf16 %v259, %v257
  %v284 = vpack.c.bf16 %v260, %v258
  %v285 = vpack.c.bf16 %v263, %v261
  %v286 = vpack.c.bf16 %v264, %v262
  %v287 = vpack.c.bf16 %v267, %v265
  %v288 = vpack.c.bf16 %v268, %v266
  %v289 = vpack.c.bf16 %v271, %v269
  %v290 = vpack.c.bf16 %v272, %v270
  %v291 = vpack.c.bf16 %v275, %v273
  %v292 = vpack.c.bf16 %v276, %v274
  %v309 = vunpack.c.l.b16 %v277
  %v310 = vunpack.c.l.b16 %v278
  %v311 = vunpack.c.h.b16 %v277
  %v312 = vunpack.c.h.b16 %v278
  %v313 = vunpack.c.l.b16 %v279
  %v314 = vunpack.c.l.b16 %v280
  %v315 = vunpack.c.h.b16 %v279
  %v316 = vunpack.c.h.b16 %v280
  %v317 = vunpack.c.l.b16 %v281
  %v318 = vunpack.c.l.b16 %v282
  %v319 = vunpack.c.h.b16 %v281
  %v320 = vunpack.c.h.b16 %v282
  %v321 = vunpack.c.l.b16 %v283
  %v322 = vunpack.c.l.b16 %v284
  %v323 = vunpack.c.h.b16 %v283
  %v324 = vunpack.c.h.b16 %v284
  %v325 = vunpack.c.l.b16 %v285
  %v326 = vunpack.c.l.b16 %v286
  %v327 = vunpack.c.h.b16 %v285
  %v328 = vunpack.c.h.b16 %v286
  %v329 = vunpack.c.l.b16 %v287
  %v330 = vunpack.c.l.b16 %v288
  %v331 = vunpack.c.h.b16 %v287
  %v332 = vunpack.c.h.b16 %v288
  %v333 = vunpack.c.l.b16 %v289
  %v334 = vunpack.c.l.b16 %v290
  %v335 = vunpack.c.h.b16 %v289
  %v336 = vunpack.c.h.b16 %v290
  %v337 = vunpack.c.l.b16 %v291
  %v338 = vunpack.c.l.b16 %v292
  %v339 = vunpack.c.h.b16 %v291
  %v340 = vunpack.c.h.b16 %v292
  %v341 = vpack.c.b16 %v310, %v309
  %v342 = vpack.c.b16 %v312, %v311
  %v343 = vpack.c.b16 %v314, %v313
  %v344 = vpack.c.b16 %v316, %v315
  %v345 = vpack.c.b16 %v318, %v317
  %v346 = vpack.c.b16 %v320, %v319
  %v347 = vpack.c.b16 %v322, %v321
  %v348 = vpack.c.b16 %v324, %v323
  %v349 = vpack.c.b16 %v326, %v325
  %v350 = vpack.c.b16 %v328, %v327
  %v351 = vpack.c.b16 %v330, %v329
  %v352 = vpack.c.b16 %v332, %v331
  %v353 = vpack.c.b16 %v334, %v333
  %v354 = vpack.c.b16 %v336, %v335
  %v355 = vpack.c.b16 %v338, %v337
  %v356 = vpack.c.b16 %v340, %v339
  %373 = vst [vmem:[%s3] sm:$0xff] %v341
  %374 = vst [vmem:[%s3 + $0x8] sm:$0xff] %v342
  %375 = vst [vmem:[%s3 + $0x10] sm:$0xff] %v343
  %376 = vst [vmem:[%s3 + $0x18] sm:$0xff] %v344
  %377 = vst [vmem:[%s3 + $0x20] sm:$0xff] %v345
  %378 = vst [vmem:[%s3 + $0x28] sm:$0xff] %v346
  %379 = vst [vmem:[%s3 + $0x30] sm:$0xff] %v347
  %380 = vst [vmem:[%s3 + $0x38] sm:$0xff] %v348
  %381 = vst [vmem:[%s3 + $0x40] sm:$0xff] %v349
  %382 = vst [vmem:[%s3 + $0x48] sm:$0xff] %v350
  %383 = vst [vmem:[%s3 + $0x50] sm:$0xff] %v351
  %384 = vst [vmem:[%s3 + $0x58] sm:$0xff] %v352
  %385 = vst [vmem:[%s3 + $0x60] sm:$0xff] %v353
  %386 = vst [vmem:[%s3 + $0x68] sm:$0xff] %v354
  %387 = vst [vmem:[%s3 + $0x70] sm:$0xff] %v355
  %388 = vst [vmem:[%s3 + $0x78] sm:$0xff] %v356
  // Predicated region
  $region14: #{pointwise_spatial_attention.2} parent=0 // pred_check
    _
  $region15: #{pointwise_spatial_attention.2} parent=0 // pred_check_branch
    %390 = sbr.rel (0) target = $region17
  $region16: #{pointwise_spatial_attention.2} parent=0 // pred_region
    _
  $region17: #{pointwise_spatial_attention.2} parent=0 // pred_fallthru
    _
  // Predicated region
  $region18: #{pointwise_spatial_attention.2} parent=0 // pred_check
    _
  $region19: #{pointwise_spatial_attention.2} parent=0 // pred_check_branch
    %392 = sbr.rel (0) target = $region21
  $region20: #{pointwise_spatial_attention.2} parent=0 // pred_region
    _
  $region21: #{pointwise_spatial_attention.2} parent=0 // pred_fallthru
    _

// kernel: pointwise_spatial_attention.3
$region0: #{pointwise_spatial_attention.3}
  #allocation0 [shape = 'u32[]', space=smem, size = 0x4, offset = 0x4, fixed_abs, tag = 'smem constant byte address 0x4 - core index']
  #allocation1 [shape = 'u32[144,128]{1,0:T(1,128)}', space=vmem, size = 0x12000, scoped, tag = 'internal scratch']
  %s0 = inlined_call_operand.vmem [shape: bf16[2,64,256], index: 0, kind: input, shape index: {}]
  %s1 = inlined_call_operand.vmem [shape: bf16[2,128,128], index: 1, kind: input, shape index: {}]
  %s2 = inlined_call_operand.vmem [shape: f32[2,1,128], index: 2, kind: input, shape index: {}]
  %s3 = inlined_call_operand.vmem [shape: bf16[2,128,64], index: 3, kind: input, shape index: {}]
  %s4 = inlined_call_operand.hbm [shape: f32[2,64,256], index: 4, kind: output, shape index: {}]
  %s5 = sld [smem:[#allocation0]]
  $region90: #{pointwise_spatial_attention.3} parent=0
    _
  %s7 = ssub.s32 1, %s5
  %s8 = scalar_select 0, %s7, %s5
  $region1: #{pointwise_spatial_attention.3} parent=0
    #allocation2 [shape = 'u8[32768]{0}', space=vmem, size = 0x8000, scoped, tag = 'input window, operand 0']
    #allocation3 [shape = 'u8[65536]{0}', space=vmem, size = 0x10000, scoped, tag = 'output window, operand 0']
    #allocation4 [shape = 's32[2]{0}', space=sflag, size = 0x8, scoped, tag = 'scoped memory for pointwise_spatial_attention.3']
    %9 = vsyncpa [#allocation4], 0
    %s10 = scalar_lea.sflag [#allocation4], 1
    %11 = vsyncpa %s10, 0
    loop: start=0, step=1, limit=6
    $region2: #{pointwise_spatial_attention.3} parent=1 // loop_pre_header
      _
    $region3: #{pointwise_spatial_attention.3} parent=1 // loop_header
      %s13 = sphi 0, %s17
      %p14 = scmp.ge.s32.totalorder %s13, 6
      %s20 = sphi 0, %s39
      %s21 = sphi 0, %s35
      %s22 = sphi 0, %s31
      %s23 = sphi 0, %s20
      %s24 = sphi 0, %s21
      %s25 = sphi 0, %s22
      %s26 = sphi 0, %s23
      %s27 = sphi 0, %s24
      %s28 = sphi 0, %s25
      %s44 = sphi 0, %s46
      %s47 = sphi 0, %s44
      %s48 = sphi 0, %s47
      %s64 = sphi 0, %s48
      %s70 = sphi 0, %s72
      %s73 = sphi 0, %s70
      %s74 = sphi 0, %s73
      %s90 = sphi 0, %s74
      %s96 = sphi 0, %s98
      %s99 = sphi 0, %s96
      %s100 = sphi 0, %s99
      %s116 = sphi 0, %s100
      %s122 = sphi 0, %s124
      %s125 = sphi 0, %s122
      %s126 = sphi 0, %s125
      %s142 = sphi 0, %s126
      %s152 = sphi 0, %s154
      %s155 = sphi 0, %s152
      %s156 = sphi 0, %s155
      %s172 = sphi 0, %s156
    $region4: #{pointwise_spatial_attention.3} parent=1 // loop_header_branch
      %16 = sbr.rel (%p14) target = $region8
    $region5: #{pointwise_spatial_attention.3} parent=1 // loop_body
      %s18 = ssub.s32 %s13, 1
      %s19 = ssub.s32 %s13, 2
      %s29 = sadd.s32 1, %s22
      %p30 = scmp.ge.s32.totalorder %s29, 1
      %s31 = scalar_select %p30, 0, %s29
      %s32 = sadd.s32 1, %s21
      %s33 = scalar_select %p30, %s32, %s21
      %p34 = scmp.ge.s32.totalorder %s33, 2
      %s35 = scalar_select %p34, 0, %s33
      %s36 = sadd.s32 1, %s20
      %s37 = scalar_select %p34, %s36, %s20
      %p38 = scmp.ge.s32.totalorder %s37, 2
      %s39 = scalar_select %p38, 0, %s37
      %s40 = ssub.s32 %s21, %s35
      %s41 = ssub.s32 %s20, %s39
      %s42 = sor.u32 %s40, %s41
      %p43 = scmp.eq.s32.totalorder %s42, 0
      %s45 = sadd.s32 %s44, 1
      %s46 = scalar_select %p43, %s44, %s45
      %p49 = pneg %p43
      %p50 = scmp.eq.s32.totalorder %s13, 3
      %p51 = por %p49, %p50
      %p52 = scmp.ne.s32.totalorder %s44, %s47
      %p53 = scmp.eq.s32.totalorder %s13, 0
      %p54 = por %p52, %p53
      %p55 = scmp.ne.s32.totalorder %s44, %s47
      %p56 = scmp.eq.s32.totalorder %s18, 3
      %p57 = por %p55, %p56
      %p58 = scmp.ne.s32.totalorder %s47, %s48
      %p59 = scmp.eq.s32.totalorder %s18, 0
      %p60 = por %p58, %p59
      %p61 = scmp.ne.s32.totalorder %s47, %s48
      %p62 = scmp.eq.s32.totalorder %s19, 3
      %p63 = por %p61, %p62
      %p65 = scmp.ne.s32.totalorder %s48, %s64
      %p66 = scmp.eq.s32.totalorder %s19, 0
      %p67 = por %p65, %p66
      %s68 = ssub.s32 %s20, %s39
      %p69 = scmp.eq.s32.totalorder %s68, 0
      %s71 = sadd.s32 %s70, 1
      %s72 = scalar_select %p69, %s70, %s71
      %p75 = pneg %p69
      %p76 = scmp.eq.s32.totalorder %s13, 3
      %p77 = por %p75, %p76
      %p78 = scmp.ne.s32.totalorder %s70, %s73
      %p79 = scmp.eq.s32.totalorder %s13, 0
      %p80 = por %p78, %p79
      %p81 = scmp.ne.s32.totalorder %s70, %s73
      %p82 = scmp.eq.s32.totalorder %s18, 3
      %p83 = por %p81, %p82
      %p84 = scmp.ne.s32.totalorder %s73, %s74
      %p85 = scmp.eq.s32.totalorder %s18, 0
      %p86 = por %p84, %p85
      %p87 = scmp.ne.s32.totalorder %s73, %s74
      %p88 = scmp.eq.s32.totalorder %s19, 3
      %p89 = por %p87, %p88
      %p91 = scmp.ne.s32.totalorder %s74, %s90
      %p92 = scmp.eq.s32.totalorder %s19, 0
      %p93 = por %p91, %p92
      %s94 = ssub.s32 %s20, %s39
      %p95 = scmp.eq.s32.totalorder %s94, 0
      %s97 = sadd.s32 %s96, 1
      %s98 = scalar_select %p95, %s96, %s97
      %p101 = pneg %p95
      %p102 = scmp.eq.s32.totalorder %s13, 3
      %p103 = por %p101, %p102
      %p104 = scmp.ne.s32.totalorder %s96, %s99
      %p105 = scmp.eq.s32.totalorder %s13, 0
      %p106 = por %p104, %p105
      %p107 = scmp.ne.s32.totalorder %s96, %s99
      %p108 = scmp.eq.s32.totalorder %s18, 3
      %p109 = por %p107, %p108
      %p110 = scmp.ne.s32.totalorder %s99, %s100
      %p111 = scmp.eq.s32.totalorder %s18, 0
      %p112 = por %p110, %p111
      %p113 = scmp.ne.s32.totalorder %s99, %s100
      %p114 = scmp.eq.s32.totalorder %s19, 3
      %p115 = por %p113, %p114
      %p117 = scmp.ne.s32.totalorder %s100, %s116
      %p118 = scmp.eq.s32.totalorder %s19, 0
      %p119 = por %p117, %p118
      %s120 = ssub.s32 %s20, %s39
      %p121 = scmp.eq.s32.totalorder %s120, 0
      %s123 = sadd.s32 %s122, 1
      %s124 = scalar_select %p121, %s122, %s123
      %p127 = pneg %p121
      %p128 = scmp.eq.s32.totalorder %s13, 3
      %p129 = por %p127, %p128
      %p130 = scmp.ne.s32.totalorder %s122, %s125
      %p131 = scmp.eq.s32.totalorder %s13, 0
      %p132 = por %p130, %p131
      %p133 = scmp.ne.s32.totalorder %s122, %s125
      %p134 = scmp.eq.s32.totalorder %s18, 3
      %p135 = por %p133, %p134
      %p136 = scmp.ne.s32.totalorder %s125, %s126
      %p137 = scmp.eq.s32.totalorder %s18, 0
      %p138 = por %p136, %p137
      %p139 = scmp.ne.s32.totalorder %s125, %s126
      %p140 = scmp.eq.s32.totalorder %s19, 3
      %p141 = por %p139, %p140
      %p143 = scmp.ne.s32.totalorder %s126, %s142
      %p144 = scmp.eq.s32.totalorder %s19, 0
      %p145 = por %p143, %p144
      %s146 = ssub.s32 %s21, %s35
      %s147 = ssub.s32 %s22, %s31
      %s148 = sor.u32 %s146, %s147
      %s149 = ssub.s32 %s20, %s39
      %s150 = sor.u32 %s148, %s149
      %p151 = scmp.eq.s32.totalorder %s150, 0
      %s153 = sadd.s32 %s152, 1
      %s154 = scalar_select %p151, %s152, %s153
      %p157 = pneg %p151
      %p158 = scmp.eq.s32.totalorder %s13, 3
      %p159 = por %p157, %p158
      %p160 = scmp.ne.s32.totalorder %s152, %s155
      %p161 = scmp.eq.s32.totalorder %s13, 0
      %p162 = por %p160, %p161
      %p163 = scmp.ne.s32.totalorder %s152, %s155
      %p164 = scmp.eq.s32.totalorder %s18, 3
      %p165 = por %p163, %p164
      %p166 = scmp.ne.s32.totalorder %s155, %s156
      %p167 = scmp.eq.s32.totalorder %s18, 0
      %p168 = por %p166, %p167
      %p169 = scmp.ne.s32.totalorder %s155, %s156
      %p170 = scmp.eq.s32.totalorder %s19, 3
      %p171 = por %p169, %p170
      %p173 = scmp.ne.s32.totalorder %s156, %s172
      %p174 = scmp.eq.s32.totalorder %s19, 0
      %p175 = por %p173, %p174
      %p176 = scmp.le.s32.totalorder 1, %s13
      %p177 = scmp.lt.s32.totalorder %s13, 5
      %p178 = pnand %p176, %p177
      %p179 = pneg %p178
      // Predicated region
      $region9: #{pointwise_spatial_attention.3} parent=5 // pred_check
        _
      $region10: #{pointwise_spatial_attention.3} parent=5 // pred_check_branch
        %181 = sbr.rel (%p178) target = $region12
      $region11: #{pointwise_spatial_attention.3} parent=5 // pred_region
        %s182 = ssub.s32 %s13, 1
      $region12: #{pointwise_spatial_attention.3} parent=5 // pred_fallthru
        _
      %p183 = scmp.lt.s32.totalorder %s13, 4
      // Predicated region
      $region13: #{pointwise_spatial_attention.3} parent=5 // pred_check
        %p184 = pneg %p183
      $region14: #{pointwise_spatial_attention.3} parent=5 // pred_check_branch
        %186 = sbr.rel (%p184) target = $region16
      $region15: #{pointwise_spatial_attention.3} parent=5 // pred_region
        // Predicated region
        $region17: #{pointwise_spatial_attention.3} parent=15 // pred_check
          %p187 = pneg %p54
        $region18: #{pointwise_spatial_attention.3} parent=15 // pred_check_branch
          %189 = sbr.rel (%p187) target = $region20
        $region19: #{pointwise_spatial_attention.3} parent=15 // pred_region
          %s190 = sand.u32 %s44, 1
          %s191 = sand.u32 %s44, 1
          %s192 = smul.addr %s191, 32
          %s193 = scalar_lea.vmem [#allocation2], %s192
          %s194 = smul.addr %s21, 16
          %s195 = sadd.s32 %s20, %s194
          %s196 = smul.addr %s195, 4
          %s197 = scalar_lea.vmem %s0, %s196
          // Predicated region
          $region21: #{pointwise_spatial_attention.3} parent=19 // pred_check
            _
          $region22: #{pointwise_spatial_attention.3} parent=19 // pred_check_branch
            %199 = sbr.rel (0) target = $region24
          $region23: #{pointwise_spatial_attention.3} parent=19 // pred_region
            // Predicated region
            $region25: #{pointwise_spatial_attention.3} parent=23 // pred_check
              _
            $region26: #{pointwise_spatial_attention.3} parent=23 // pred_check_branch
              %201 = sbr.rel target = $region28
            $region27: #{pointwise_spatial_attention.3} parent=23 // pred_region
              // Predicated region
              $region40: #{pointwise_spatial_attention.3} parent=27 // pred_check
                _
              $region41: #{pointwise_spatial_attention.3} parent=27 // pred_check_branch
                %230 = sbr.rel (0) target = $region43
              $region42: #{pointwise_spatial_attention.3} parent=27 // pred_region
                loop: start=0, step=1, limit=1
                $region44: #{pointwise_spatial_attention.3} parent=42 // loop_pre_header
                  _
                $region45: #{pointwise_spatial_attention.3} parent=42 // loop_header
                  %s232 = sphi 0, %s236
                  %p233 = scmp.ge.s32.totalorder %s232, 1
                  %s237 = sphi %s197, %s197
                  %s238 = sphi %s193, %s193
                $region46: #{pointwise_spatial_attention.3} parent=42 // loop_header_branch
                  %235 = sbr.rel (%p233) target = $region50
                $region47: #{pointwise_spatial_attention.3} parent=42 // loop_body
                  _
                $region48: #{pointwise_spatial_attention.3} parent=42 // loop_footer
                  %s236 = sadd.s32 1, %s232
                $region49: #{pointwise_spatial_attention.3} parent=42 // loop_footer_branch
                  %231 = sbr.rel target = $region45
                $region50: #{pointwise_spatial_attention.3} parent=42 // loop_exit
                  _
                loop: start=0, step=1, limit=1
                $region51: #{pointwise_spatial_attention.3} parent=42 // loop_pre_header
                  _
                $region52: #{pointwise_spatial_attention.3} parent=42 // loop_header
                  %s241 = sphi 0, %s245
                  %p242 = scmp.ge.s32.totalorder %s241, 1
                  %s246 = sphi %s197, %s197
                  %s247 = sphi %s193, %s193
                $region53: #{pointwise_spatial_attention.3} parent=42 // loop_header_branch
                  %244 = sbr.rel (%p242) target = $region57
                $region54: #{pointwise_spatial_attention.3} parent=42 // loop_body
                  %v248 = vld [vmem:[%s246] sm:$0xf]
                  %249 = vst [vmem:[%s247] sm:$0xf] %v248
                  %v250 = vld [vmem:[%s246 + $0x8] sm:$0xf]
                  %251 = vst [vmem:[%s247 + $0x4] sm:$0xf] %v250
                  %v252 = vld [vmem:[%s246 + $0x10] sm:$0xf]
                  %253 = vst [vmem:[%s247 + $0x8] sm:$0xf] %v252
                  %v254 = vld [vmem:[%s246 + $0x18] sm:$0xf]
                  %255 = vst [vmem:[%s247 + $0xc] sm:$0xf] %v254
                  %v256 = vld [vmem:[%s246 + $0x20] sm:$0xf]
                  %257 = vst [vmem:[%s247 + $0x10] sm:$0xf] %v256
                  %v258 = vld [vmem:[%s246 + $0x28] sm:$0xf]
                  %259 = vst [vmem:[%s247 + $0x14] sm:$0xf] %v258
                  %v260 = vld [vmem:[%s246 + $0x30] sm:$0xf]
                  %261 = vst [vmem:[%s247 + $0x18] sm:$0xf] %v260
                  %v262 = vld [vmem:[%s246 + $0x38] sm:$0xf]
                  %263 = vst [vmem:[%s247 + $0x1c] sm:$0xf] %v262
                $region55: #{pointwise_spatial_attention.3} parent=42 // loop_footer
                  %s245 = sadd.s32 1, %s241
                $region56: #{pointwise_spatial_attention.3} parent=42 // loop_footer_branch
                  %240 = sbr.rel target = $region52
                $region57: #{pointwise_spatial_attention.3} parent=42 // loop_exit
                  _
              $region43: #{pointwise_spatial_attention.3} parent=27 // pred_fallthru
                _
            $region28: #{pointwise_spatial_attention.3} parent=23 // pred_fallthru
              _
            // Predicated region
            $region29: #{pointwise_spatial_attention.3} parent=23 // pred_check
              _
            $region30: #{pointwise_spatial_attention.3} parent=23 // pred_check_branch
              %203 = sbr.rel (0) target = $region32
            $region31: #{pointwise_spatial_attention.3} parent=23 // pred_region
              loop: start=0, step=1, limit=1
              $region33: #{pointwise_spatial_attention.3} parent=31 // loop_pre_header
                _
              $region34: #{pointwise_spatial_attention.3} parent=31 // loop_header
                %s206 = sphi 0, %s210
                %p207 = scmp.ge.s32.totalorder %s206, 1
                %s211 = sphi %s197, %s197
                %s212 = sphi %s193, %s193
              $region35: #{pointwise_spatial_attention.3} parent=31 // loop_header_branch
                %209 = sbr.rel (%p207) target = $region39
              $region36: #{pointwise_spatial_attention.3} parent=31 // loop_body
                %v213 = vld [vmem:[%s211] sm:$0xf]
                %214 = vst [vmem:[%s212] sm:$0xf] %v213
                %v215 = vld [vmem:[%s211 + $0x8] sm:$0xf]
                %216 = vst [vmem:[%s212 + $0x4] sm:$0xf] %v215
                %v217 = vld [vmem:[%s211 + $0x10] sm:$0xf]
                %218 = vst [vmem:[%s212 + $0x8] sm:$0xf] %v217
                %v219 = vld [vmem:[%s211 + $0x18] sm:$0xf]
                %220 = vst [vmem:[%s212 + $0xc] sm:$0xf] %v219
                %v221 = vld [vmem:[%s211 + $0x20] sm:$0xf]
                %222 = vst [vmem:[%s212 + $0x10] sm:$0xf] %v221
                %v223 = vld [vmem:[%s211 + $0x28] sm:$0xf]
                %224 = vst [vmem:[%s212 + $0x14] sm:$0xf] %v223
                %v225 = vld [vmem:[%s211 + $0x30] sm:$0xf]
                %226 = vst [vmem:[%s212 + $0x18] sm:$0xf] %v225
                %v227 = vld [vmem:[%s211 + $0x38] sm:$0xf]
                %228 = vst [vmem:[%s212 + $0x1c] sm:$0xf] %v227
              $region37: #{pointwise_spatial_attention.3} parent=31 // loop_footer
                %s210 = sadd.s32 1, %s206
              $region38: #{pointwise_spatial_attention.3} parent=31 // loop_footer_branch
                %205 = sbr.rel target = $region34
              $region39: #{pointwise_spatial_attention.3} parent=31 // loop_exit
                _
            $region32: #{pointwise_spatial_attention.3} parent=23 // pred_fallthru
              _
          $region24: #{pointwise_spatial_attention.3} parent=19 // pred_fallthru
            _
          %264 = vnop
        $region20: #{pointwise_spatial_attention.3} parent=15 // pred_fallthru
          _
        // Predicated region
        $region58: #{pointwise_spatial_attention.3} parent=15 // pred_check
          %p265 = pneg %p80
        $region59: #{pointwise_spatial_attention.3} parent=15 // pred_check_branch
          %267 = sbr.rel (%p265) target = $region61
        $region60: #{pointwise_spatial_attention.3} parent=15 // pred_region
          %p268 = scmp.lt.s32.totalorder %s20, 1
          %s269 = scalar_select %p268, %s20, 1
          %s270 = smul.addr %s269, 16
          %s271 = smul.addr %s270, 4
          %s272 = scalar_lea.vmem %s1, %s271
        $region61: #{pointwise_spatial_attention.3} parent=15 // pred_fallthru
          _
        // Predicated region
        $region62: #{pointwise_spatial_attention.3} parent=15 // pred_check
          %p273 = pneg %p106
        $region63: #{pointwise_spatial_attention.3} parent=15 // pred_check_branch
          %275 = sbr.rel (%p273) target = $region65
        $region64: #{pointwise_spatial_attention.3} parent=15 // pred_region
          %p276 = scmp.lt.s32.totalorder %s20, 1
          %s277 = scalar_select %p276, %s20, 1
          %s278 = scalar_lea.vmem %s2, %s277
        $region65: #{pointwise_spatial_attention.3} parent=15 // pred_fallthru
          _
        // Predicated region
        $region66: #{pointwise_spatial_attention.3} parent=15 // pred_check
          %p279 = pneg %p132
        $region67: #{pointwise_spatial_attention.3} parent=15 // pred_check_branch
          %281 = sbr.rel (%p279) target = $region69
        $region68: #{pointwise_spatial_attention.3} parent=15 // pred_region
          %p282 = scmp.lt.s32.totalorder %s20, 1
          %s283 = scalar_select %p282, %s20, 1
          %s284 = smul.addr %s283, 16
          %s285 = smul.addr %s284, 4
          %s286 = scalar_lea.vmem %s3, %s285
        $region69: #{pointwise_spatial_attention.3} parent=15 // pred_fallthru
          _
      $region16: #{pointwise_spatial_attention.3} parent=5 // pred_fallthru
        _
      %p287 = scmp.le.s32.totalorder 1, %s13
      %p288 = scmp.lt.s32.totalorder %s13, 5
      %p289 = pnand %p287, %p288
      %p290 = pneg %p289
      // Predicated region
      $region70: #{pointwise_spatial_attention.3} parent=5 // pred_check
        _
      $region71: #{pointwise_spatial_attention.3} parent=5 // pred_check_branch
        %292 = sbr.rel (%p289) target = $region73
      $region72: #{pointwise_spatial_attention.3} parent=5 // pred_region
        %s293 = ssub.s32 %s13, 1
        %s294 = sand.u32 %s47, 1
        %s295 = sand.u32 %s47, 1
        %s296 = smul.addr %s295, 32
        %s297 = scalar_lea.vmem [#allocation2], %s296
        // Predicated region
        $region74: #{pointwise_spatial_attention.3} parent=72 // pred_check
          %p298 = pneg %p60
        $region75: #{pointwise_spatial_attention.3} parent=72 // pred_check_branch
          %300 = sbr.rel (%p298) target = $region77
        $region76: #{pointwise_spatial_attention.3} parent=72 // pred_region
          _
        $region77: #{pointwise_spatial_attention.3} parent=72 // pred_fallthru
          _
        %s301 = sand.u32 %s47, 1
        %s302 = sand.u32 %s47, 1
        %s303 = smul.addr %s302, 32
        %s304 = scalar_lea.vmem [#allocation2], %s303
        %p305 = pneg %p60
        %p306 = pneg %p57
        %p307 = scmp.lt.s32.totalorder %s23, 1
        %s308 = scalar_select %p307, %s23, 1
        %s309 = smul.addr %s308, 16
        %s310 = smul.addr %s309, 4
        %s311 = scalar_lea.vmem %s1, %s310
        %p312 = pneg %p86
        %p313 = pneg %p83
        %p314 = scmp.lt.s32.totalorder %s23, 1
        %s315 = scalar_select %p314, %s23, 1
        %s316 = scalar_lea.vmem %s2, %s315
        %p317 = pneg %p112
        %p318 = pneg %p109
        %p319 = scmp.lt.s32.totalorder %s23, 1
        %s320 = scalar_select %p319, %s23, 1
        %s321 = smul.addr %s320, 16
        %s322 = smul.addr %s321, 4
        %s323 = scalar_lea.vmem %s3, %s322
        %p324 = pneg %p138
        %p325 = pneg %p135
        %p326 = pneg %p168
        %p327 = pneg %p165
        %s328 = sand.u32 %s155, 1
        %s329 = scalar_lea.sflag [#allocation4], %s328
        %s330 = sand.u32 %s155, 1
        %s331 = smul.addr %s330, 64
        %s332 = scalar_lea.vmem [#allocation3], %s331
        %p333 = scmp.lt.s32.totalorder %s23, 1
        %s334 = scalar_select %p333, %s23, 1
        %s335 = smul.addr %s334, 16
        %s336 = smul.addr %s335, 4
        %s337 = scalar_lea.vmem %s1, %s336
        %p338 = scmp.lt.s32.totalorder %s23, 1
        %s339 = scalar_select %p338, %s23, 1
        %s340 = scalar_lea.vmem %s2, %s339
        %p341 = scmp.lt.s32.totalorder %s23, 1
        %s342 = scalar_select %p341, %s23, 1
        %s343 = smul.addr %s342, 16
        %s344 = smul.addr %s343, 4
        %s345 = scalar_lea.vmem %s3, %s344
        %s346 = smul.u32 8, %s25
        %s348 = smul.u32 %s25, 64
        %v349 = vld [vmem:[%s297] sm:$0xf]
        %v350 = vld [vmem:[%s297 + $0x4] sm:$0xf]
        %v351 = vld [vmem:[%s297 + $0x8] sm:$0xf]
        %v352 = vld [vmem:[%s297 + $0xc] sm:$0xf]
        %v353 = vld [vmem:[%s297 + $0x10] sm:$0xf]
        %v354 = vld [vmem:[%s297 + $0x14] sm:$0xf]
        %v355 = vld [vmem:[%s297 + $0x18] sm:$0xf]
        %v356 = vld [vmem:[%s297 + $0x1c] sm:$0xf]
        %v357 = vld [vmem:[%s337] sm:$0xf]
        %v358 = vld [vmem:[%s337 + $0x4] sm:$0xf]
        %v359 = vld [vmem:[%s337 + $0x8] sm:$0xf]
        %v360 = vld [vmem:[%s337 + $0xc] sm:$0xf]
        %v361 = vld [vmem:[%s337 + $0x10] sm:$0xf]
        %v362 = vld [vmem:[%s337 + $0x14] sm:$0xf]
        %v363 = vld [vmem:[%s337 + $0x18] sm:$0xf]
        %v364 = vld [vmem:[%s337 + $0x1c] sm:$0xf]
        %v365 = vld [vmem:[%s337 + $0x20] sm:$0xf]
        %v366 = vld [vmem:[%s337 + $0x24] sm:$0xf]
        %v367 = vld [vmem:[%s337 + $0x28] sm:$0xf]
        %v368 = vld [vmem:[%s337 + $0x2c] sm:$0xf]
        %v369 = vld [vmem:[%s337 + $0x30] sm:$0xf]
        %v370 = vld [vmem:[%s337 + $0x34] sm:$0xf]
        %v371 = vld [vmem:[%s337 + $0x38] sm:$0xf]
        %v372 = vld [vmem:[%s337 + $0x3c] sm:$0xf]
        %v373 = vld [vmem:[%s340] sm:$0x1]
        %v374 = vld [vmem:[%s345] sm:$0xf]
        %v375 = vld [vmem:[%s345 + $0x4] sm:$0xf]
        %v376 = vld [vmem:[%s345 + $0x8] sm:$0xf]
        %v377 = vld [vmem:[%s345 + $0xc] sm:$0xf]
        %v378 = vld [vmem:[%s345 + $0x10] sm:$0xf]
        %v379 = vld [vmem:[%s345 + $0x14] sm:$0xf]
        %v380 = vld [vmem:[%s345 + $0x18] sm:$0xf]
        %v381 = vld [vmem:[%s345 + $0x1c] sm:$0xf]
        %v382 = vld [vmem:[%s345 + $0x20] sm:$0xf]
        %v383 = vld [vmem:[%s345 + $0x24] sm:$0xf]
        %v384 = vld [vmem:[%s345 + $0x28] sm:$0xf]
        %v385 = vld [vmem:[%s345 + $0x2c] sm:$0xf]
        %v386 = vld [vmem:[%s345 + $0x30] sm:$0xf]
        %v387 = vld [vmem:[%s345 + $0x34] sm:$0xf]
        %v388 = vld [vmem:[%s345 + $0x38] sm:$0xf]
        %v389 = vld [vmem:[%s345 + $0x3c] sm:$0xf]
        %s390 = sshra.s32 %s348, 3
        %s391 = sand.u32 %s348, 7
        %s392 = smul.addr %s390, 4
        %s393 = scalar_lea.vmem %s297, %s392 [#allocation2]
        %v394 = vld [vmem:[%s393] sm:$0xf]
        %v395 = vld [vmem:[%s393 + $0x4] sm:$0xf]
        %v396 = vld [vmem:[%s393 + $0x8] sm:$0xf]
        %v397 = vld [vmem:[%s393 + $0xc] sm:$0xf]
        %v398 = vld [vmem:[%s393 + $0x10] sm:$0xf]
        %v399 = vld [vmem:[%s393 + $0x14] sm:$0xf]
        %v400 = vld [vmem:[%s393 + $0x18] sm:$0xf]
        %v401 = vld [vmem:[%s393 + $0x1c] sm:$0xf]
        %v403 = vlaneseq
        %v404 = vshrl.u32 %v403, 7
        %v405 = vsub.s32 0, %v404
        %v406 = vrot.slane %v373, %v405
        %v416 = vunpack.c.l.b16 %v394
        %v417 = vunpack.c.l.b16 %v395
        %v418 = vunpack.c.l.b16 %v396
        %v419 = vunpack.c.l.b16 %v397
        %v420 = vunpack.c.l.b16 %v398
        %v421 = vunpack.c.l.b16 %v399
        %v422 = vunpack.c.l.b16 %v400
        %v423 = vunpack.c.l.b16 %v401
        %v424 = vpack.c.b16 %v417, %v416
        %v425 = vpack.c.b16 %v419, %v418
        %v426 = vpack.c.b16 %v421, %v420
        %v427 = vpack.c.b16 %v423, %v422
        %v448 = vunpack.c.l.b16 %v357
        %v449 = vunpack.c.l.b16 %v358
        %v450 = vunpack.c.l.b16 %v359
        %v451 = vunpack.c.l.b16 %v360
        %v452 = vunpack.c.l.b16 %v361
        %v453 = vunpack.c.l.b16 %v362
        %v454 = vunpack.c.l.b16 %v363
        %v455 = vunpack.c.l.b16 %v364
        %v456 = vunpack.c.l.b16 %v365
        %v457 = vunpack.c.l.b16 %v366
        %v458 = vunpack.c.l.b16 %v367
        %v459 = vunpack.c.l.b16 %v368
        %v460 = vunpack.c.l.b16 %v369
        %v461 = vunpack.c.l.b16 %v370
        %v462 = vunpack.c.l.b16 %v371
        %v463 = vunpack.c.l.b16 %v372
        %v464 = vpack.c.b16 %v449, %v448
        %v465 = vpack.c.b16 %v451, %v450
        %v466 = vpack.c.b16 %v453, %v452
        %v467 = vpack.c.b16 %v455, %v454
        %v468 = vpack.c.b16 %v457, %v456
        %v469 = vpack.c.b16 %v459, %v458
        %v470 = vpack.c.b16 %v461, %v460
        %v471 = vpack.c.b16 %v463, %v462
        %480 = vmatprep.subr.bf16.mxu0 0
        %481 = vmatpush1.bf16.msra.mxu0 %v464
        %482 = vmatprep.subr.bf16.mxu0 0
        %483 = vmatpush1.bf16.msra.mxu0 %v465
        %484 = vmatprep.subr.bf16.mxu0 0
        %485 = vmatpush1.bf16.msra.mxu0 %v466
        %486 = vmatprep.subr.bf16.mxu0 0
        %487 = vmatpush1.bf16.msra.mxu0 %v467
        %488 = vmatprep.subr.bf16.mxu0 0
        %489 = vmatpush1.bf16.msra.mxu0 %v468
        %490 = vmatprep.subr.bf16.mxu0 0
        %491 = vmatpush1.bf16.msra.mxu0 %v469
        %492 = vmatprep.subr.bf16.mxu0 0
        %493 = vmatpush1.bf16.msra.mxu0 %v470
        %494 = vmatprep.subr.bf16.mxu0 0
        %495 = vmatpush1.bf16.msra.mxu0 %v471
        %496 = vmatprep.subr.bf16.mxu0 0
        %497 = vmatpush1.bf16.msra.mxu0 0
        %498 = vmatprep.subr.bf16.mxu0 0
        %499 = vmatpush1.bf16.msra.mxu0 0
        %500 = vmatprep.subr.bf16.mxu0 0
        %501 = vmatpush1.bf16.msra.mxu0 0
        %502 = vmatprep.subr.bf16.mxu0 0
        %503 = vmatpush1.bf16.msra.mxu0 0
        %504 = vmatprep.subr.bf16.mxu0 0
        %505 = vmatpush1.bf16.msra.mxu0 0
        %506 = vmatprep.subr.bf16.mxu0 0
        %507 = vmatpush1.bf16.msra.mxu0 0
        %508 = vmatprep.subr.bf16.mxu0 0
        %509 = vmatpush1.bf16.msra.mxu0 0
        %510 = vmatprep.subr.bf16.mxu0 0
        %511 = vmatpush1.bf16.msra.mxu0 0
        %512 = vmatprep.mubr.bf16.mxu0 0
        %513 = vmatmul.mubr.bf16.gmra.mrb[0].mxu0 %v424
        %v514 = vpop.f32.mrb[0].mxu0
        %v515 = vadd.f32 %v406, %v514
        %v516 = vpop.f32.mrb[0].mxu0
        %v517 = vpop.f32.mrb[0].mxu0
        %v518 = vadd.f32 %v406, %v517
        %v519 = vpop.f32.mrb[0].mxu0
        %520 = vmatprep.mubr.bf16.mxu0 0
        %521 = vmatmul.mubr.bf16.gmra.mrb[0].mxu0 %v425
        %v522 = vpop.f32.mrb[0].mxu0
        %v523 = vadd.f32 %v406, %v522
        %v524 = vpop.f32.mrb[0].mxu0
        %v525 = vpop.f32.mrb[0].mxu0
        %v526 = vadd.f32 %v406, %v525
        %v527 = vpop.f32.mrb[0].mxu0
        %528 = vmatprep.mubr.bf16.mxu0 0
        %529 = vmatmul.mubr.bf16.gmra.mrb[0].mxu0 %v426
        %v530 = vpop.f32.mrb[0].mxu0
        %v531 = vadd.f32 %v406, %v530
        %v532 = vpop.f32.mrb[0].mxu0
        %v533 = vpop.f32.mrb[0].mxu0
        %v534 = vadd.f32 %v406, %v533
        %v535 = vpop.f32.mrb[0].mxu0
        %536 = vmatprep.mubr.bf16.mxu0 0
        %537 = vmatmul.mubr.bf16.gmra.mrb[0].mxu0 %v427
        %v538 = vpop.f32.mrb[0].mxu0
        %v539 = vadd.f32 %v406, %v538
        %v540 = vpop.f32.mrb[0].mxu0
        %v541 = vpop.f32.mrb[0].mxu0
        %v542 = vadd.f32 %v406, %v541
        %v543 = vpop.f32.mrb[0].mxu0
        %544 = vdwg.mxu0
        %v545 = vmax.f32 %v515, 0.0
        %v546 = vmax.f32 %v518, 0.0
        %v547 = vmax.f32 %v523, 0.0
        %v548 = vmax.f32 %v526, 0.0
        %v549 = vmax.f32 %v531, 0.0
        %v550 = vmax.f32 %v534, 0.0
        %v551 = vmax.f32 %v539, 0.0
        %v552 = vmax.f32 %v542, 0.0
        %v553 = vpack.c.bf16 %v546, %v545
        %v554 = vpack.c.bf16 %v548, %v547
        %v555 = vpack.c.bf16 %v550, %v549
        %v556 = vpack.c.bf16 %v552, %v551
        %v573 = vunpack.c.l.b16 %v374
        %v574 = vunpack.c.l.b16 %v375
        %v575 = vunpack.c.l.b16 %v376
        %v576 = vunpack.c.l.b16 %v377
        %v577 = vunpack.c.l.b16 %v378
        %v578 = vunpack.c.l.b16 %v379
        %v579 = vunpack.c.l.b16 %v380
        %v580 = vunpack.c.l.b16 %v381
        %v581 = vunpack.c.l.b16 %v382
        %v582 = vunpack.c.l.b16 %v383
        %v583 = vunpack.c.l.b16 %v384
        %v584 = vunpack.c.l.b16 %v385
        %v585 = vunpack.c.l.b16 %v386
        %v586 = vunpack.c.l.b16 %v387
        %v587 = vunpack.c.l.b16 %v388
        %v588 = vunpack.c.l.b16 %v389
        %v589 = vpack.c.b16 %v574, %v573
        %v590 = vpack.c.b16 %v576, %v575
        %v591 = vpack.c.b16 %v578, %v577
        %v592 = vpack.c.b16 %v580, %v579
        %v593 = vpack.c.b16 %v582, %v581
        %v594 = vpack.c.b16 %v584, %v583
        %v595 = vpack.c.b16 %v586, %v585
        %v596 = vpack.c.b16 %v588, %v587
        %605 = vmatprep.subr.bf16.mxu0 0
        %606 = vmatpush1.bf16.msra.mxu0 %v589
        %607 = vmatprep.subr.bf16.mxu0 0
        %608 = vmatpush1.bf16.msra.mxu0 %v590
        %609 = vmatprep.subr.bf16.mxu0 0
        %610 = vmatpush1.bf16.msra.mxu0 %v591
        %611 = vmatprep.subr.bf16.mxu0 0
        %612 = vmatpush1.bf16.msra.mxu0 %v592
        %613 = vmatprep.subr.bf16.mxu0 0
        %614 = vmatpush1.bf16.msra.mxu0 %v593
        %615 = vmatprep.subr.bf16.mxu0 0
        %616 = vmatpush1.bf16.msra.mxu0 %v594
        %617 = vmatprep.subr.bf16.mxu0 0
        %618 = vmatpush1.bf16.msra.mxu0 %v595
        %619 = vmatprep.subr.bf16.mxu0 0
        %620 = vmatpush1.bf16.msra.mxu0 %v596
        %621 = vmatprep.subr.bf16.mxu0 0
        %622 = vmatpush1.bf16.msra.mxu0 0
        %623 = vmatprep.subr.bf16.mxu0 0
        %624 = vmatpush1.bf16.msra.mxu0 0
        %625 = vmatprep.subr.bf16.mxu0 0
        %626 = vmatpush1.bf16.msra.mxu0 0
        %627 = vmatprep.subr.bf16.mxu0 0
        %628 = vmatpush1.bf16.msra.mxu0 0
        %629 = vmatprep.subr.bf16.mxu0 0
        %630 = vmatpush1.bf16.msra.mxu0 0
        %631 = vmatprep.subr.bf16.mxu0 0
        %632 = vmatpush1.bf16.msra.mxu0 0
        %633 = vmatprep.subr.bf16.mxu0 0
        %634 = vmatpush1.bf16.msra.mxu0 0
        %635 = vmatprep.subr.bf16.mxu0 0
        %636 = vmatpush1.bf16.msra.mxu0 0
        %637 = vmatprep.mubr.bf16.mxu0 0
        %638 = vmatmul.mubr.bf16.gmra.mrb[0].mxu0 %v553
        %v639 = vpop.f32.mrb[0].mxu0
        %v640 = vadd.f32 0.0, %v639
        %v641 = vpop.f32.mrb[0].mxu0
        %v642 = vpop.f32.mrb[0].mxu0
        %v643 = vadd.f32 0.0, %v642
        %v644 = vpop.f32.mrb[0].mxu0
        %645 = vmatprep.mubr.bf16.mxu0 0
        %646 = vmatmul.mubr.bf16.gmra.mrb[0].mxu0 %v554
        %v647 = vpop.f32.mrb[0].mxu0
        %v648 = vadd.f32 0.0, %v647
        %v649 = vpop.f32.mrb[0].mxu0
        %v650 = vpop.f32.mrb[0].mxu0
        %v651 = vadd.f32 0.0, %v650
        %v652 = vpop.f32.mrb[0].mxu0
        %653 = vmatprep.mubr.bf16.mxu0 0
        %654 = vmatmul.mubr.bf16.gmra.mrb[0].mxu0 %v555
        %v655 = vpop.f32.mrb[0].mxu0
        %v656 = vadd.f32 0.0, %v655
        %v657 = vpop.f32.mrb[0].mxu0
        %v658 = vpop.f32.mrb[0].mxu0
        %v659 = vadd.f32 0.0, %v658
        %v660 = vpop.f32.mrb[0].mxu0
        %661 = vmatprep.mubr.bf16.mxu0 0
        %662 = vmatmul.mubr.bf16.gmra.mrb[0].mxu0 %v556
        %v663 = vpop.f32.mrb[0].mxu0
        %v664 = vadd.f32 0.0, %v663
        %v665 = vpop.f32.mrb[0].mxu0
        %v666 = vpop.f32.mrb[0].mxu0
        %v667 = vadd.f32 0.0, %v666
        %v668 = vpop.f32.mrb[0].mxu0
        %669 = vdwg.mxu0
        %vm670 = vcmask 523264
        %v671 = vsel %vm670, %v640, -inf
        %672 = vmax.xlane.f32.xlu0 %v671
        %v673 = vpop.xlane.xlu0 %672
        %v674 = vsel %vm670, %v643, -inf
        %675 = vmax.xlane.f32.xlu0 %v674
        %v676 = vpop.xlane.xlu0 %675
        %v677 = vsel %vm670, %v648, -inf
        %678 = vmax.xlane.f32.xlu0 %v677
        %v679 = vpop.xlane.xlu0 %678
        %v680 = vsel %vm670, %v651, -inf
        %681 = vmax.xlane.f32.xlu0 %v680
        %v682 = vpop.xlane.xlu0 %681
        %v683 = vsel %vm670, %v656, -inf
        %684 = vmax.xlane.f32.xlu0 %v683
        %v685 = vpop.xlane.xlu0 %684
        %v686 = vsel %vm670, %v659, -inf
        %687 = vmax.xlane.f32.xlu0 %v686
        %v688 = vpop.xlane.xlu0 %687
        %v689 = vsel %vm670, %v664, -inf
        %690 = vmax.xlane.f32.xlu0 %v689
        %v691 = vpop.xlane.xlu0 %690
        %v692 = vsel %vm670, %v667, -inf
        %693 = vmax.xlane.f32.xlu0 %v692
        %v694 = vpop.xlane.xlu0 %693
        %v695 = vsub.f32 %v640, %v673
        %v696 = vsub.f32 %v643, %v676
        %v697 = vsub.f32 %v648, %v679
        %v698 = vsub.f32 %v651, %v682
        %v699 = vsub.f32 %v656, %v685
        %v700 = vsub.f32 %v659, %v688
        %v701 = vsub.f32 %v664, %v691
        %v702 = vsub.f32 %v667, %v694
        %v703 = vmul.f32 %v695, 1.442695
        %v704 = vpow.pop %v703
        %v705 = vmul.f32 %v696, 1.442695
        %v706 = vpow.pop %v705
        %v707 = vmul.f32 %v697, 1.442695
        %v708 = vpow.pop %v707
        %v709 = vmul.f32 %v698, 1.442695
        %v710 = vpow.pop %v709
        %v711 = vmul.f32 %v699, 1.442695
        %v712 = vpow.pop %v711
        %v713 = vmul.f32 %v700, 1.442695
        %v714 = vpow.pop %v713
        %v715 = vmul.f32 %v701, 1.442695
        %v716 = vpow.pop %v715
        %v717 = vmul.f32 %v702, 1.442695
        %v718 = vpow.pop %v717
        %v719 = vsel %vm670, %v704, 0.0
        %720 = vadd.xlane.f32.xlu0 %v719
        %v721 = vpop.xlane.xlu0 %720
        %v722 = vsel %vm670, %v706, 0.0
        %723 = vadd.xlane.f32.xlu0 %v722
        %v724 = vpop.xlane.xlu0 %723
        %v725 = vsel %vm670, %v708, 0.0
        %726 = vadd.xlane.f32.xlu0 %v725
        %v727 = vpop.xlane.xlu0 %726
        %v728 = vsel %vm670, %v710, 0.0
        %729 = vadd.xlane.f32.xlu0 %v728
        %v730 = vpop.xlane.xlu0 %729
        %v731 = vsel %vm670, %v712, 0.0
        %732 = vadd.xlane.f32.xlu0 %v731
        %v733 = vpop.xlane.xlu0 %732
        %v734 = vsel %vm670, %v714, 0.0
        %735 = vadd.xlane.f32.xlu0 %v734
        %v736 = vpop.xlane.xlu0 %735
        %v737 = vsel %vm670, %v716, 0.0
        %738 = vadd.xlane.f32.xlu0 %v737
        %v739 = vpop.xlane.xlu0 %738
        %v740 = vsel %vm670, %v718, 0.0
        %741 = vadd.xlane.f32.xlu0 %v740
        %v742 = vpop.xlane.xlu0 %741
        %v743 = vpack.c.bf16 %v706, %v704
        %v744 = vpack.c.bf16 %v710, %v708
        %v745 = vpack.c.bf16 %v714, %v712
        %v746 = vpack.c.bf16 %v718, %v716
        %v755 = vunpack.c.l.b16 %v349
        %v756 = vunpack.c.l.b16 %v350
        %v757 = vunpack.c.l.b16 %v351
        %v758 = vunpack.c.l.b16 %v352
        %v759 = vunpack.c.l.b16 %v353
        %v760 = vunpack.c.l.b16 %v354
        %v761 = vunpack.c.l.b16 %v355
        %v762 = vunpack.c.l.b16 %v356
        %v763 = vpack.c.b16 %v756, %v755
        %v764 = vpack.c.b16 %v758, %v757
        %v765 = vpack.c.b16 %v760, %v759
        %v766 = vpack.c.b16 %v762, %v761
        %v772 = vsel %vm670, %v743, 0
        %v775 = vsel %vm670, %v744, 0
        %v778 = vsel %vm670, %v745, 0
        %v781 = vsel %vm670, %v746, 0
        %783 = vmatprep.subr.bf16.mxu0 0
        %784 = vmatpush1.bf16.msra.mxu0 %v763
        %785 = vmatprep.subr.bf16.mxu0 0
        %786 = vmatpush1.bf16.msra.mxu0 %v764
        %787 = vmatprep.subr.bf16.mxu0 0
        %788 = vmatpush1.bf16.msra.mxu0 %v765
        %789 = vmatprep.subr.bf16.mxu0 0
        %790 = vmatpush1.bf16.msra.mxu0 %v766
        %791 = vmatprep.subr.bf16.mxu0 0
        %792 = vmatpush1.bf16.msra.mxu0 0
        %793 = vmatprep.subr.bf16.mxu0 0
        %794 = vmatpush1.bf16.msra.mxu0 0
        %795 = vmatprep.subr.bf16.mxu0 0
        %796 = vmatpush1.bf16.msra.mxu0 0
        %797 = vmatprep.subr.bf16.mxu0 0
        %798 = vmatpush1.bf16.msra.mxu0 0
        %799 = vmatprep.subr.bf16.mxu0 0
        %800 = vmatpush1.bf16.msra.mxu0 0
        %801 = vmatprep.subr.bf16.mxu0 0
        %802 = vmatpush1.bf16.msra.mxu0 0
        %803 = vmatprep.subr.bf16.mxu0 0
        %804 = vmatpush1.bf16.msra.mxu0 0
        %805 = vmatprep.subr.bf16.mxu0 0
        %806 = vmatpush1.bf16.msra.mxu0 0
        %807 = vmatprep.subr.bf16.mxu0 0
        %808 = vmatpush1.bf16.msra.mxu0 0
        %809 = vmatprep.subr.bf16.mxu0 0
        %810 = vmatpush1.bf16.msra.mxu0 0
        %811 = vmatprep.subr.bf16.mxu0 0
        %812 = vmatpush1.bf16.msra.mxu0 0
        %813 = vmatprep.subr.bf16.mxu0 0
        %814 = vmatpush1.bf16.msra.mxu0 0
        %815 = vmatprep.mubr.bf16.mxu0 0
        %816 = vmatmul.mubr.bf16.gmra.mrb[0].mxu0 %v772
        %v817 = vpop.f32.mrb[0].mxu0
        %v818 = vadd.f32 0.0, %v817
        %v819 = vpop.f32.mrb[0].mxu0
        %v820 = vpop.f32.mrb[0].mxu0
        %v821 = vadd.f32 0.0, %v820
        %v822 = vpop.f32.mrb[0].mxu0
        %823 = vmatprep.mubr.bf16.mxu0 0
        %824 = vmatmul.mubr.bf16.gmra.mrb[0].mxu0 %v775
        %v825 = vpop.f32.mrb[0].mxu0
        %v826 = vadd.f32 0.0, %v825
        %v827 = vpop.f32.mrb[0].mxu0
        %v828 = vpop.f32.mrb[0].mxu0
        %v829 = vadd.f32 0.0, %v828
        %v830 = vpop.f32.mrb[0].mxu0
        %831 = vmatprep.mubr.bf16.mxu0 0
        %832 = vmatmul.mubr.bf16.gmra.mrb[0].mxu0 %v778
        %v833 = vpop.f32.mrb[0].mxu0
        %v834 = vadd.f32 0.0, %v833
        %v835 = vpop.f32.mrb[0].mxu0
        %v836 = vpop.f32.mrb[0].mxu0
        %v837 = vadd.f32 0.0, %v836
        %v838 = vpop.f32.mrb[0].mxu0
        %839 = vmatprep.mubr.bf16.mxu0 0
        %840 = vmatmul.mubr.bf16.gmra.mrb[0].mxu0 %v781
        %v841 = vpop.f32.mrb[0].mxu0
        %v842 = vadd.f32 0.0, %v841
        %v843 = vpop.f32.mrb[0].mxu0
        %v844 = vpop.f32.mrb[0].mxu0
        %v845 = vadd.f32 0.0, %v844
        %v846 = vpop.f32.mrb[0].mxu0
        %847 = vdwg.mxu0
        %v848 = vrcp.pop %v721
        %v849 = vrcp.pop %v724
        %v850 = vrcp.pop %v727
        %v851 = vrcp.pop %v730
        %v852 = vrcp.pop %v733
        %v853 = vrcp.pop %v736
        %v854 = vrcp.pop %v739
        %v855 = vrcp.pop %v742
        %v856 = vmul.f32 %v818, %v848
        %v857 = vmul.f32 %v821, %v849
        %v858 = vmul.f32 %v826, %v850
        %v859 = vmul.f32 %v829, %v851
        %v860 = vmul.f32 %v834, %v852
        %v861 = vmul.f32 %v837, %v853
        %v862 = vmul.f32 %v842, %v854
        %v863 = vmul.f32 %v845, %v855
        %864 = vst [vmem:[%s332] sm:$0xff] %v856
        %865 = vst [vmem:[%s332 + $0x8] sm:$0xff] %v857
        %866 = vst [vmem:[%s332 + $0x10] sm:$0xff] %v858
        %867 = vst [vmem:[%s332 + $0x18] sm:$0xff] %v859
        %868 = vst [vmem:[%s332 + $0x20] sm:$0xff] %v860
        %869 = vst [vmem:[%s332 + $0x28] sm:$0xff] %v861
        %870 = vst [vmem:[%s332 + $0x30] sm:$0xff] %v862
        %871 = vst [vmem:[%s332 + $0x38] sm:$0xff] %v863
        %s872 = sand.u32 %s155, 1
        %s873 = scalar_lea.sflag [#allocation4], %s872
        %s874 = sand.u32 %s155, 1
        %s875 = smul.addr %s874, 64
        %s876 = scalar_lea.vmem [#allocation3], %s875
        // Predicated region
        $region78: #{pointwise_spatial_attention.3} parent=72 // pred_check
          %p877 = pneg %p165
        $region79: #{pointwise_spatial_attention.3} parent=72 // pred_check_branch
          %879 = sbr.rel (%p877) target = $region81
        $region80: #{pointwise_spatial_attention.3} parent=72 // pred_region
          %s880 = smul.u32 8, %s25
          %s882 = ssub.s32 1024, 1024
          %883 = vsyncadd %s873, %s882
          %s884 = smul.addr %s880, 2
          %s885 = sadd.s32 %s23, %s884
          %s886 = smul.addr %s24, 16
          %s887 = sadd.s32 %s885, %s886
          %s888 = smul.addr %s887, 128
          %s889 = scalar_lea.hbm %s4, %s888
          %s890 = sshll.u32 %s876, 4
          %s891 = int_to_ptr.vmem [resolvable:$true] %s890
          %896 = dma.vmem_to_hbm [thread:$0]  %s891, 1024, %s889, %s873, 128, 256, 8
        $region81: #{pointwise_spatial_attention.3} parent=72 // pred_fallthru
          _
      $region73: #{pointwise_spatial_attention.3} parent=5 // pred_fallthru
        _
      %p897 = scmp.le.s32.totalorder 2, %s13
      // Predicated region
      $region82: #{pointwise_spatial_attention.3} parent=5 // pred_check
        %p898 = pneg %p897
      $region83: #{pointwise_spatial_attention.3} parent=5 // pred_check_branch
        %900 = sbr.rel (%p898) target = $region85
      $region84: #{pointwise_spatial_attention.3} parent=5 // pred_region
        %s901 = ssub.s32 %s13, 2
        // Predicated region
        $region86: #{pointwise_spatial_attention.3} parent=84 // pred_check
          %p902 = pneg %p171
        $region87: #{pointwise_spatial_attention.3} parent=84 // pred_check_branch
          %904 = sbr.rel (%p902) target = $region89
        $region88: #{pointwise_spatial_attention.3} parent=84 // pred_region
          %s905 = sand.u32 %s156, 1
          %s906 = scalar_lea.sflag [#allocation4], %s905
          %s907 = sand.u32 %s156, 1
          %s908 = smul.addr %s907, 64
          %s909 = scalar_lea.vmem [#allocation3], %s908
          %910 = dma.done %s906, 1024
        $region89: #{pointwise_spatial_attention.3} parent=84 // pred_fallthru
          _
      $region85: #{pointwise_spatial_attention.3} parent=5 // pred_fallthru
        _
    $region6: #{pointwise_spatial_attention.3} parent=1 // loop_footer
      %s17 = sadd.s32 1, %s13
    $region7: #{pointwise_spatial_attention.3} parent=1 // loop_footer_branch
      %12 = sbr.rel target = $region3
    $region8: #{pointwise_spatial_attention.3} parent=1 // loop_exit
      _
    %911 = vsyncpa [#allocation4], 1
    %s912 = scalar_lea.sflag [#allocation4], 1
    %913 = vsyncpa %s912, 1

</llo_original>
